<compile_context>
chip_gen: v7x
topology: tpu7x:2x2x1
jax: 0.10.0
libtpu: 0.0.40
codegen_flags: <defaults>
</compile_context>

<pallas_src>
import functools

import jax
import jax.numpy as jnp
from jax import lax
from jax.experimental import pallas as pl
from jax.experimental.pallas import tpu as pltpu

SUBLANE = 8  # vreg sublane count (f32)


def _round_up(n, m):
    return ((n + m - 1) // m) * m


def mlp_kernel(affine_ref, x_ref, w1t_ref, b1_ref, w2t_ref, b2_ref, o_ref):
    """One batch tile: o = w_out * tanh(relu(x@W1^T + b1) @ W2^T + b2) + b_out.

    Weight-norm scaling is pre-folded into W1^T / W2^T in the wrapper.
    """
    # First linear (MXU) + bias + ReLU (VPU).
    h = jnp.dot(x_ref[...], w1t_ref[...],
                preferred_element_type=jnp.float32,
                precision=lax.Precision.HIGHEST)
    h = jnp.maximum(h + b1_ref[...], 0.0)            # (TB, hid) + (1, hid)

    # Second linear (MXU) + bias, Tanh (EUP).
    y = jnp.dot(h, w2t_ref[...],
                preferred_element_type=jnp.float32,
                precision=lax.Precision.HIGHEST)
    y = jnp.tanh(y + b2_ref[...])                     # (TB, out) + (1, out)

    # Output affine; scalars come from SMEM (scalar slot has slack).
    w_out = affine_ref[0]
    b_out = affine_ref[1]
    o_ref[...] = (w_out * y + b_out).astype(o_ref.dtype)


def simple_mlp(x, v1, b1, v2, b2, g1, g2, min_y, max_y, *, tile_b=512):
    """x: (B, in); v1: (hid, in); b1: (hid,); v2: (out, hid); b2: (out,); g1/g2 scalar."""
    B, in_dim = x.shape
    hid_dim = v1.shape[0]
    out_dim = v2.shape[0]

    f32 = jnp.float32

    # weight_norm(dim=None): W = g * V / ||V||_F  -> fold the scalar into the
    # pre-transposed weights once in the wrapper (tiny, on already-materialized
    # buffers) instead of per-element multiplies inside the kernel.
    s1 = g1 / jnp.sqrt(jnp.sum(v1.astype(f32) * v1.astype(f32)))
    s2 = g2 / jnp.sqrt(jnp.sum(v2.astype(f32) * v2.astype(f32)))
    w1t = (v1.astype(f32) * s1).T                 # (in_dim, hid_dim)
    w2t = (v2.astype(f32) * s2).T                 # (hid_dim, out_dim)
    b1r = b1.astype(f32).reshape(1, hid_dim)
    b2r = b2.astype(f32).reshape(1, out_dim)

    # Output affine scalars, kept as traced values -> SMEM (no recompile per value).
    min_y = jnp.asarray(min_y, f32)
    max_y = jnp.asarray(max_y, f32)
    affine = jnp.stack([(max_y - min_y) / 2.0, (max_y + min_y) / 2.0])   # (2,)

    # Batch tiling: tile_b is a multiple of 8; only the batch dim is (cheaply)
    # padded when B is not a multiple of tile_b.  Feature dims stay unpadded.
    tile_b = max(SUBLANE, min(_round_up(tile_b, SUBLANE), _round_up(B, SUBLANE)))
    B_p = _round_up(B, tile_b)
    nb = B_p // tile_b
    x_in = x if B_p == B else jnp.pad(x, ((0, B_p - B), (0, 0)))

    # VMEM budget: double-buffered x/out tiles (tile_b=512 -> ~48 KiB f32 here)
    # plus resident W1^T/W2^T/biases (a few KiB) — far inside even v7x's 32 MiB
    # scoped default, so no vmem_limit_bytes override needed at these sizes.
    y_p = pl.pallas_call(
        mlp_kernel,
        out_shape=jax.ShapeDtypeStruct((B_p, out_dim), x.dtype),
        grid=(nb,),
        in_specs=[
            # output-affine scalars live in SMEM (untiled, no per-step DMA).
            pl.BlockSpec(memory_space=pltpu.MemorySpace.SMEM),
            # batch tile of activations — pipelined over the grid, unpadded lanes.
            pl.BlockSpec((tile_b, in_dim), lambda i: (i, 0)),
            # weights / biases: constant index_map -> stay VMEM-resident.
            pl.BlockSpec((in_dim, hid_dim), lambda i: (0, 0)),
            pl.BlockSpec((1, hid_dim), lambda i: (0, 0)),
            pl.BlockSpec((hid_dim, out_dim), lambda i: (0, 0)),
            pl.BlockSpec((1, out_dim), lambda i: (0, 0)),
        ],
        out_specs=pl.BlockSpec((tile_b, out_dim), lambda i: (i, 0)),
        compiler_params=pltpu.CompilerParams(
            dimension_semantics=("parallel",)),   # batch tiles -> both TCs on v7x
    )(affine, x_in, w1t, b1r, w2t, b2r)

    return y_p if B_p == B else y_p[:B]


if __name__ == "__main__":
    # Small shapes consistent with SimpleMLP(in_dim, hid_dim, out_dim, min_y, max_y)
    B, in_dim, hid_dim, out_dim = 8, 16, 32, 8
    min_y, max_y = -2.0, 3.0

    key = jax.random.PRNGKey(0)
    kx, kv1, kb1, kv2, kb2, kg1, kg2 = jax.random.split(key, 7)

    x = jax.random.normal(kx, (B, in_dim), dtype=jnp.float32)
    v1 = jax.random.normal(kv1, (hid_dim, in_dim), dtype=jnp.float32) * 0.2
    b1 = jax.random.normal(kb1, (hid_dim,), dtype=jnp.float32) * 0.1
    v2 = jax.random.normal(kv2, (out_dim, hid_dim), dtype=jnp.float32) * 0.2
    b2 = jax.random.normal(kb2, (out_dim,), dtype=jnp.float32) * 0.1
    g1 = jax.random.uniform(kg1, (), jnp.float32, 0.5, 1.5)
    g2 = jax.random.uniform(kg2, (), jnp.float32, 0.5, 1.5)

    y = simple_mlp(x, v1, b1, v2, b2, g1, g2, min_y, max_y)
    y = jax.block_until_ready(y)

    # Plain-JAX reference matching the PyTorch module's forward exactly.
    w1 = g1 * v1 / jnp.sqrt(jnp.sum(v1 * v1))
    w2 = g2 * v2 / jnp.sqrt(jnp.sum(v2 * v2))
    h_ref = jnp.maximum(
        jnp.dot(x, w1.T, precision=lax.Precision.HIGHEST) + b1, 0.0)
    main_ref = jnp.tanh(
        jnp.dot(h_ref, w2.T, precision=lax.Precision.HIGHEST) + b2)
    ref = (max_y - min_y) / 2.0 * main_ref + (max_y + min_y) / 2.0

    assert y.shape == (B, out_dim)
    assert jnp.allclose(y, ref, atol=1e-5, rtol=1e-5), "mismatch vs reference"
    print("KERNEL_OK")
</pallas_src>

<mosaic_0001>
module attributes {stable_mosaic.version = 11 : i64} {
  func.func @mlp_kernel(%arg0: i32, %arg1: memref<2xf32, #tpu.memory_space<smem>>, %arg2: memref<8x16xf32, #tpu.memory_space<vmem>>, %arg3: memref<16x32xf32, #tpu.memory_space<vmem>>, %arg4: memref<1x32xf32, #tpu.memory_space<vmem>>, %arg5: memref<32x8xf32, #tpu.memory_space<vmem>>, %arg6: memref<1x8xf32, #tpu.memory_space<vmem>>, %arg7: memref<8x8xf32, #tpu.memory_space<vmem>>) attributes {dimension_semantics = [#tpu.dimension_semantics<parallel>], iteration_bounds = array<i64: 1>, scalar_prefetch = 0 : i64, scratch_operands = 0 : i64, tpu.core_type = #tpu.core_type<tc>, window_params = [{transform_indices = @transform_0, window_bounds = array<i64: 2>}, {transform_indices = @transform_1, window_bounds = array<i64: 8, 16>}, {pipeline_mode = #tpu.pipeline_mode<synchronous>, transform_indices = @transform_2, window_bounds = array<i64: 16, 32>}, {pipeline_mode = #tpu.pipeline_mode<synchronous>, transform_indices = @transform_3, window_bounds = array<i64: 1, 32>}, {pipeline_mode = #tpu.pipeline_mode<synchronous>, transform_indices = @transform_4, window_bounds = array<i64: 32, 8>}, {pipeline_mode = #tpu.pipeline_mode<synchronous>, transform_indices = @transform_5, window_bounds = array<i64: 1, 8>}, {transform_indices = @transform_6, window_bounds = array<i64: 8, 8>}]} {
    %c0 = arith.constant 0 : index
    %c0_0 = arith.constant 0 : index
    %0 = vector.load %arg2[%c0, %c0_0] : memref<8x16xf32, #tpu.memory_space<vmem>>, vector<8x16xf32>
    %c0_1 = arith.constant 0 : index
    %c0_2 = arith.constant 0 : index
    %1 = vector.load %arg3[%c0_1, %c0_2] : memref<16x32xf32, #tpu.memory_space<vmem>>, vector<16x32xf32>
    %cst = arith.constant dense<0.000000e+00> : vector<8x32xf32>
    %2 = tpu.matmul %0, %1, %cst {dimension_numbers = #tpu.dot_dimension_numbers<[1], [0], [0], [1], [0, 0, 1, 1], [], []>, precision = #tpu.contract_precision<fp32>} : vector<8x16xf32>, vector<16x32xf32>, vector<8x32xf32> -> vector<8x32xf32>
    %c0_3 = arith.constant 0 : index
    %c0_4 = arith.constant 0 : index
    %3 = vector.load %arg4[%c0_3, %c0_4] : memref<1x32xf32, #tpu.memory_space<vmem>>, vector<1x32xf32>
    %4 = vector.broadcast %3 : vector<1x32xf32> to vector<8x32xf32>
    %5 = arith.addf %2, %4 : vector<8x32xf32>
    %cst_5 = arith.constant 0.000000e+00 : f32
    %6 = vector.broadcast %cst_5 : f32 to vector<8x32xf32>
    %7 = arith.maximumf %5, %6 : vector<8x32xf32>
    %c0_6 = arith.constant 0 : index
    %c0_7 = arith.constant 0 : index
    %8 = vector.load %arg5[%c0_6, %c0_7] : memref<32x8xf32, #tpu.memory_space<vmem>>, vector<32x8xf32>
    %cst_8 = arith.constant dense<0.000000e+00> : vector<8x8xf32>
    %9 = tpu.matmul %7, %8, %cst_8 {dimension_numbers = #tpu.dot_dimension_numbers<[1], [0], [0], [1], [0, 0, 1, 1], [], []>, precision = #tpu.contract_precision<fp32>} : vector<8x32xf32>, vector<32x8xf32>, vector<8x8xf32> -> vector<8x8xf32>
    %c0_9 = arith.constant 0 : index
    %c0_10 = arith.constant 0 : index
    %10 = vector.load %arg6[%c0_9, %c0_10] : memref<1x8xf32, #tpu.memory_space<vmem>>, vector<1x8xf32>
    %11 = vector.broadcast %10 : vector<1x8xf32> to vector<8x8xf32>
    %12 = arith.addf %9, %11 : vector<8x8xf32>
    %13 = math.tanh %12 : vector<8x8xf32>
    %c0_11 = arith.constant 0 : index
    %14 = memref.load %arg1[%c0_11] : memref<2xf32, #tpu.memory_space<smem>>
    %c1 = arith.constant 1 : index
    %15 = memref.load %arg1[%c1] : memref<2xf32, #tpu.memory_space<smem>>
    %16 = vector.broadcast %14 : f32 to vector<8x8xf32>
    %17 = arith.mulf %16, %13 : vector<8x8xf32>
    %18 = vector.broadcast %15 : f32 to vector<8x8xf32>
    %19 = arith.addf %17, %18 : vector<8x8xf32>
    %c0_12 = arith.constant 0 : index
    %c0_13 = arith.constant 0 : index
    %20 = vector.load %arg7[%c0_12, %c0_13] : memref<8x8xf32, #tpu.memory_space<vmem>>, vector<8x8xf32>
    tpu.vector_store %arg7[%c0_12, %c0_13], %19 {strides = array<i32>} : memref<8x8xf32, #tpu.memory_space<vmem>>, vector<8x8xf32>,
    return
  }
  func.func @transform_0(%arg0: i32) -> i32 {
    %c0_i32 = arith.constant 0 : i32
    %c0_i32_0 = arith.constant 0 : i32
    return %c0_i32 : i32
  }
  func.func @transform_1(%arg0: i32) -> (i32, i32) {
    %c0_i32 = arith.constant 0 : i32
    %c0_i32_0 = arith.constant 0 : i32
    return %arg0, %c0_i32 : i32, i32
  }
  func.func @transform_2(%arg0: i32) -> (i32, i32) {
    %c0_i32 = arith.constant 0 : i32
    %c0_i32_0 = arith.constant 0 : i32
    %c0_i32_1 = arith.constant 0 : i32
    return %c0_i32, %c0_i32_0 : i32, i32
  }
  func.func @transform_3(%arg0: i32) -> (i32, i32) {
    %c0_i32 = arith.constant 0 : i32
    %c0_i32_0 = arith.constant 0 : i32
    %c0_i32_1 = arith.constant 0 : i32
    return %c0_i32, %c0_i32_0 : i32, i32
  }
  func.func @transform_4(%arg0: i32) -> (i32, i32) {
    %c0_i32 = arith.constant 0 : i32
    %c0_i32_0 = arith.constant 0 : i32
    %c0_i32_1 = arith.constant 0 : i32
    return %c0_i32, %c0_i32_0 : i32, i32
  }
  func.func @transform_5(%arg0: i32) -> (i32, i32) {
    %c0_i32 = arith.constant 0 : i32
    %c0_i32_0 = arith.constant 0 : i32
    %c0_i32_1 = arith.constant 0 : i32
    return %c0_i32, %c0_i32_0 : i32, i32
  }
  func.func @transform_6(%arg0: i32) -> (i32, i32) {
    %c0_i32 = arith.constant 0 : i32
    %c0_i32_0 = arith.constant 0 : i32
    return %arg0, %c0_i32 : i32, i32
  }
}

</mosaic_0001>

<llo_original>
// kernel: tpu_custom_call.1
$region0: #{tpu_custom_call.1}
  #allocation0 [shape = 'u32[]', space=smem, size = 0x4, offset = 0x4, fixed_abs, tag = 'smem constant byte address 0x4 - core index']
  #allocation1 [shape = 'u32[144,128]{1,0:T(1,128)}', space=vmem, size = 0x12000, scoped, tag = 'internal scratch']
  %s0 = inlined_call_operand.vmem [shape: f32[2], index: 0, kind: input, shape index: {}]
  %s1 = inlined_call_operand.vmem [shape: f32[8,16], index: 1, kind: input, shape index: {}]
  %s2 = inlined_call_operand.vmem [shape: f32[16,32], index: 2, kind: input, shape index: {}]
  %s3 = inlined_call_operand.vmem [shape: f32[1,32], index: 3, kind: input, shape index: {}]
  %s4 = inlined_call_operand.vmem [shape: f32[32,8], index: 4, kind: input, shape index: {}]
  %s5 = inlined_call_operand.vmem [shape: f32[1,8], index: 5, kind: input, shape index: {}]
  %s6 = inlined_call_operand.hbm [shape: f32[8,8], index: 6, kind: output, shape index: {}]
  %s7 = sld [smem:[#allocation0]]
  $region38: #{tpu_custom_call.1} parent=0
    _
  %s9 = ssub.s32 1, %s7
  %s10 = scalar_select 0, %s9, %s7
  $region1: #{tpu_custom_call.1} parent=0
    #allocation2 [shape = 'u8[512]{0}', space=smem, size = 0x200, scoped, tag = 'input window, operand 0, single buffered']
    #allocation3 [shape = 's32[1]{0}', space=sflag, size = 0x4, scoped, tag = 'scoped memory for tpu_custom_call.1']
    #allocation4 [shape = 's32[1]{0}', space=sflag, size = 0x4, scoped, tag = 'scoped memory for tpu_custom_call.1']
    #allocation5 [shape = 'u8[4096]{0}', space=vmem, size = 0x1000, scoped, tag = 'output window, operand 0, single buffered']
    %11 = vsyncpa [#allocation4], 0
    %12 = vsyncpa [#allocation3], 0
    // Predicated region
    $region2: #{tpu_custom_call.1} parent=1 // pred_check
      _
    $region3: #{tpu_custom_call.1} parent=1 // pred_check_branch
      %14 = sbr.rel (0) target = $region5
    $region4: #{tpu_custom_call.1} parent=1 // pred_region
      %s16 = ssub.s32 16, 16
      %17 = vsyncadd [#allocation4], %s16
      %s19 = sshll.u32 %s0, 4
      %s20 = int_to_ptr.vmem [resolvable:$true] %s19
      %22 = dma.vmem_to_smem %s20, 16, [#allocation2], [#allocation4]
    $region5: #{tpu_custom_call.1} parent=1 // pred_fallthru
      _
    // Predicated region
    $region6: #{tpu_custom_call.1} parent=1 // pred_check
      _
    $region7: #{tpu_custom_call.1} parent=1 // pred_check_branch
      %24 = sbr.rel (0) target = $region9
    $region8: #{tpu_custom_call.1} parent=1 // pred_region
      _
    $region9: #{tpu_custom_call.1} parent=1 // pred_fallthru
      _
    // Predicated region
    $region10: #{tpu_custom_call.1} parent=1 // pred_check
      _
    $region11: #{tpu_custom_call.1} parent=1 // pred_check_branch
      %26 = sbr.rel (0) target = $region13
    $region12: #{tpu_custom_call.1} parent=1 // pred_region
      _
    $region13: #{tpu_custom_call.1} parent=1 // pred_fallthru
      _
    // Predicated region
    $region14: #{tpu_custom_call.1} parent=1 // pred_check
      _
    $region15: #{tpu_custom_call.1} parent=1 // pred_check_branch
      %28 = sbr.rel (0) target = $region17
    $region16: #{tpu_custom_call.1} parent=1 // pred_region
      _
    $region17: #{tpu_custom_call.1} parent=1 // pred_fallthru
      _
    // Predicated region
    $region18: #{tpu_custom_call.1} parent=1 // pred_check
      _
    $region19: #{tpu_custom_call.1} parent=1 // pred_check_branch
      %30 = sbr.rel (0) target = $region21
    $region20: #{tpu_custom_call.1} parent=1 // pred_region
      _
    $region21: #{tpu_custom_call.1} parent=1 // pred_fallthru
      _
    // Predicated region
    $region22: #{tpu_custom_call.1} parent=1 // pred_check
      _
    $region23: #{tpu_custom_call.1} parent=1 // pred_check_branch
      %32 = sbr.rel (0) target = $region25
    $region24: #{tpu_custom_call.1} parent=1 // pred_region
      _
    $region25: #{tpu_custom_call.1} parent=1 // pred_fallthru
      _
    // Predicated region
    $region26: #{tpu_custom_call.1} parent=1 // pred_check
      _
    $region27: #{tpu_custom_call.1} parent=1 // pred_check_branch
      %34 = sbr.rel (0) target = $region29
    $region28: #{tpu_custom_call.1} parent=1 // pred_region
      %35 = dma.done [#allocation4], 16
    $region29: #{tpu_custom_call.1} parent=1 // pred_fallthru
      _
    %36 = sfence
    %v37 = vld [vmem:[%s1] sm:$0xff]
    %v38 = vld [vmem:[%s2] sm:$0xff]
    %v39 = vld [vmem:[%s2 + $0x8] sm:$0xff]
    %v40 = vld [vmem:[%s3] sm:$0x1]
    %v42 = vlaneseq
    %v43 = vshrl.u32 %v42, 7
    %v44 = vsub.s32 0, %v43
    %v45 = vrot.slane %v40, %v44
    %vm47 = vcmask 130048
    %v49 = vsel %vm47, %v37, 0
    %51 = vmatprep.subr.mxu0 0.0
    %v52 = vand.u32 %v38, 4294901760
    %53 = vmatpush1.msra.mxu0 %v52
    %54 = vmatprep.subr.mxu0 0.0
    %v55 = vand.u32 %v39, 4294901760
    %56 = vmatpush1.msra.mxu0 %v55
    %57 = vmatprep.subr.mxu0 0.0
    %58 = vmatpush1.msra.mxu0 0.0
    %59 = vmatprep.subr.mxu0 0.0
    %60 = vmatpush1.msra.mxu0 0.0
    %61 = vmatprep.subr.mxu0 0.0
    %62 = vmatpush1.msra.mxu0 0.0
    %63 = vmatprep.subr.mxu0 0.0
    %64 = vmatpush1.msra.mxu0 0.0
    %65 = vmatprep.subr.mxu0 0.0
    %66 = vmatpush1.msra.mxu0 0.0
    %67 = vmatprep.subr.mxu0 0.0
    %68 = vmatpush1.msra.mxu0 0.0
    %69 = vmatprep.subr.mxu0 0.0
    %70 = vmatpush1.msra.mxu0 0.0
    %71 = vmatprep.subr.mxu0 0.0
    %72 = vmatpush1.msra.mxu0 0.0
    %73 = vmatprep.subr.mxu0 0.0
    %74 = vmatpush1.msra.mxu0 0.0
    %75 = vmatprep.subr.mxu0 0.0
    %76 = vmatpush1.msra.mxu0 0.0
    %77 = vmatprep.subr.mxu0 0.0
    %78 = vmatpush1.msra.mxu0 0.0
    %79 = vmatprep.subr.mxu0 0.0
    %80 = vmatpush1.msra.mxu0 0.0
    %81 = vmatprep.subr.mxu0 0.0
    %82 = vmatpush1.msra.mxu0 0.0
    %83 = vmatprep.subr.mxu0 0.0
    %84 = vmatpush1.msra.mxu0 0.0
    %85 = vmatprep.subr.mxu0 0.0
    %86 = vmatpush1.msra.mxu0 0.0
    %87 = vmatprep.subr.mxu0 0.0
    %88 = vmatpush1.msra.mxu0 0.0
    %89 = vmatprep.subr.mxu0 0.0
    %90 = vmatpush1.msra.mxu0 0.0
    %91 = vmatprep.subr.mxu0 0.0
    %92 = vmatpush1.msra.mxu0 0.0
    %93 = vmatprep.subr.mxu0 0.0
    %94 = vmatpush1.msra.mxu0 0.0
    %95 = vmatprep.subr.mxu0 0.0
    %96 = vmatpush1.msra.mxu0 0.0
    %97 = vmatprep.subr.mxu0 0.0
    %98 = vmatpush1.msra.mxu0 0.0
    %99 = vmatprep.subr.mxu0 0.0
    %100 = vmatpush1.msra.mxu0 0.0
    %101 = vmatprep.subr.mxu0 0.0
    %102 = vmatpush1.msra.mxu0 0.0
    %103 = vmatprep.subr.mxu0 0.0
    %104 = vmatpush1.msra.mxu0 0.0
    %105 = vmatprep.subr.mxu0 0.0
    %106 = vmatpush1.msra.mxu0 0.0
    %107 = vmatprep.subr.mxu0 0.0
    %108 = vmatpush1.msra.mxu0 0.0
    %109 = vmatprep.subr.mxu0 0.0
    %110 = vmatpush1.msra.mxu0 0.0
    %111 = vmatprep.subr.mxu0 0.0
    %112 = vmatpush1.msra.mxu0 0.0
    %113 = vmatprep.subr.mxu0 0.0
    %114 = vmatpush1.msra.mxu0 0.0
    %115 = vmatprep.subr.mxu0 0.0
    %116 = vmatpush1.msra.mxu0 0.0
    %117 = vmatprep.mubr.f32.mxu0 0.0
    %v118 = vand.u32 %v49, 4294901760
    %v119 = vsub.f32 %v49, %v118
    %v120 = vand.u32 %v119, 4294901760
    %v121 = vsub.f32 %v119, %v120
    %v122 = vand.u32 %v121, 4294901760
    %123 = vmatmul.mubr.f32.gmra.mrb[0].mxu0 %v122
    %v124 = vpop.f32.mrb[0].mxu0
    %v125 = vadd.f32 %v45, %v124
    %v126 = vpop.f32.mrb[0].mxu0
    %127 = vdwg.mxu0
    %128 = vmatprep.subr.mxu0 0.0
    %v129 = vand.u32 %v38, 4294901760
    %v130 = vsub.f32 %v38, %v129
    %v131 = vand.u32 %v130, 4294901760
    %v132 = vsub.f32 %v130, %v131
    %v133 = vand.u32 %v132, 4294901760
    %134 = vmatpush1.msra.mxu0 %v133
    %135 = vmatprep.subr.mxu0 0.0
    %v136 = vand.u32 %v39, 4294901760
    %v137 = vsub.f32 %v39, %v136
    %v138 = vand.u32 %v137, 4294901760
    %v139 = vsub.f32 %v137, %v138
    %v140 = vand.u32 %v139, 4294901760
    %141 = vmatpush1.msra.mxu0 %v140
    %142 = vmatprep.subr.mxu0 0.0
    %143 = vmatpush1.msra.mxu0 0.0
    %144 = vmatprep.subr.mxu0 0.0
    %145 = vmatpush1.msra.mxu0 0.0
    %146 = vmatprep.subr.mxu0 0.0
    %147 = vmatpush1.msra.mxu0 0.0
    %148 = vmatprep.subr.mxu0 0.0
    %149 = vmatpush1.msra.mxu0 0.0
    %150 = vmatprep.subr.mxu0 0.0
    %151 = vmatpush1.msra.mxu0 0.0
    %152 = vmatprep.subr.mxu0 0.0
    %153 = vmatpush1.msra.mxu0 0.0
    %154 = vmatprep.subr.mxu0 0.0
    %155 = vmatpush1.msra.mxu0 0.0
    %156 = vmatprep.subr.mxu0 0.0
    %157 = vmatpush1.msra.mxu0 0.0
    %158 = vmatprep.subr.mxu0 0.0
    %159 = vmatpush1.msra.mxu0 0.0
    %160 = vmatprep.subr.mxu0 0.0
    %161 = vmatpush1.msra.mxu0 0.0
    %162 = vmatprep.subr.mxu0 0.0
    %163 = vmatpush1.msra.mxu0 0.0
    %164 = vmatprep.subr.mxu0 0.0
    %165 = vmatpush1.msra.mxu0 0.0
    %166 = vmatprep.subr.mxu0 0.0
    %167 = vmatpush1.msra.mxu0 0.0
    %168 = vmatprep.subr.mxu0 0.0
    %169 = vmatpush1.msra.mxu0 0.0
    %170 = vmatprep.subr.mxu0 0.0
    %171 = vmatpush1.msra.mxu0 0.0
    %172 = vmatprep.subr.mxu0 0.0
    %173 = vmatpush1.msra.mxu0 0.0
    %174 = vmatprep.subr.mxu0 0.0
    %175 = vmatpush1.msra.mxu0 0.0
    %176 = vmatprep.subr.mxu0 0.0
    %177 = vmatpush1.msra.mxu0 0.0
    %178 = vmatprep.subr.mxu0 0.0
    %179 = vmatpush1.msra.mxu0 0.0
    %180 = vmatprep.subr.mxu0 0.0
    %181 = vmatpush1.msra.mxu0 0.0
    %182 = vmatprep.subr.mxu0 0.0
    %183 = vmatpush1.msra.mxu0 0.0
    %184 = vmatprep.subr.mxu0 0.0
    %185 = vmatpush1.msra.mxu0 0.0
    %186 = vmatprep.subr.mxu0 0.0
    %187 = vmatpush1.msra.mxu0 0.0
    %188 = vmatprep.subr.mxu0 0.0
    %189 = vmatpush1.msra.mxu0 0.0
    %190 = vmatprep.subr.mxu0 0.0
    %191 = vmatpush1.msra.mxu0 0.0
    %192 = vmatprep.subr.mxu0 0.0
    %193 = vmatpush1.msra.mxu0 0.0
    %194 = vmatprep.subr.mxu0 0.0
    %195 = vmatpush1.msra.mxu0 0.0
    %196 = vmatprep.subr.mxu0 0.0
    %197 = vmatpush1.msra.mxu0 0.0
    %198 = vmatprep.subr.mxu0 0.0
    %199 = vmatpush1.msra.mxu0 0.0
    %200 = vmatprep.subr.mxu0 0.0
    %201 = vmatpush1.msra.mxu0 0.0
    %202 = vmatprep.mubr.f32.mxu0 0.0
    %v203 = vand.u32 %v49, 4294901760
    %204 = vmatmul.mubr.f32.gmra.mrb[0].mxu0 %v203
    %v205 = vpop.f32.mrb[0].mxu0
    %v206 = vadd.f32 %v125, %v205
    %v207 = vpop.f32.mrb[0].mxu0
    %208 = vdwg.mxu0
    %209 = vmatprep.subr.mxu0 0.0
    %v210 = vand.u32 %v38, 4294901760
    %v211 = vsub.f32 %v38, %v210
    %212 = vmatpush1.msra.mxu0 %v211
    %213 = vmatprep.subr.mxu0 0.0
    %v214 = vand.u32 %v39, 4294901760
    %v215 = vsub.f32 %v39, %v214
    %216 = vmatpush1.msra.mxu0 %v215
    %217 = vmatprep.subr.mxu0 0.0
    %218 = vmatpush1.msra.mxu0 0.0
    %219 = vmatprep.subr.mxu0 0.0
    %220 = vmatpush1.msra.mxu0 0.0
    %221 = vmatprep.subr.mxu0 0.0
    %222 = vmatpush1.msra.mxu0 0.0
    %223 = vmatprep.subr.mxu0 0.0
    %224 = vmatpush1.msra.mxu0 0.0
    %225 = vmatprep.subr.mxu0 0.0
    %226 = vmatpush1.msra.mxu0 0.0
    %227 = vmatprep.subr.mxu0 0.0
    %228 = vmatpush1.msra.mxu0 0.0
    %229 = vmatprep.subr.mxu0 0.0
    %230 = vmatpush1.msra.mxu0 0.0
    %231 = vmatprep.subr.mxu0 0.0
    %232 = vmatpush1.msra.mxu0 0.0
    %233 = vmatprep.subr.mxu0 0.0
    %234 = vmatpush1.msra.mxu0 0.0
    %235 = vmatprep.subr.mxu0 0.0
    %236 = vmatpush1.msra.mxu0 0.0
    %237 = vmatprep.subr.mxu0 0.0
    %238 = vmatpush1.msra.mxu0 0.0
    %239 = vmatprep.subr.mxu0 0.0
    %240 = vmatpush1.msra.mxu0 0.0
    %241 = vmatprep.subr.mxu0 0.0
    %242 = vmatpush1.msra.mxu0 0.0
    %243 = vmatprep.subr.mxu0 0.0
    %244 = vmatpush1.msra.mxu0 0.0
    %245 = vmatprep.subr.mxu0 0.0
    %246 = vmatpush1.msra.mxu0 0.0
    %247 = vmatprep.subr.mxu0 0.0
    %248 = vmatpush1.msra.mxu0 0.0
    %249 = vmatprep.subr.mxu0 0.0
    %250 = vmatpush1.msra.mxu0 0.0
    %251 = vmatprep.subr.mxu0 0.0
    %252 = vmatpush1.msra.mxu0 0.0
    %253 = vmatprep.subr.mxu0 0.0
    %254 = vmatpush1.msra.mxu0 0.0
    %255 = vmatprep.subr.mxu0 0.0
    %256 = vmatpush1.msra.mxu0 0.0
    %257 = vmatprep.subr.mxu0 0.0
    %258 = vmatpush1.msra.mxu0 0.0
    %259 = vmatprep.subr.mxu0 0.0
    %260 = vmatpush1.msra.mxu0 0.0
    %261 = vmatprep.subr.mxu0 0.0
    %262 = vmatpush1.msra.mxu0 0.0
    %263 = vmatprep.subr.mxu0 0.0
    %264 = vmatpush1.msra.mxu0 0.0
    %265 = vmatprep.subr.mxu0 0.0
    %266 = vmatpush1.msra.mxu0 0.0
    %267 = vmatprep.subr.mxu0 0.0
    %268 = vmatpush1.msra.mxu0 0.0
    %269 = vmatprep.subr.mxu0 0.0
    %270 = vmatpush1.msra.mxu0 0.0
    %271 = vmatprep.subr.mxu0 0.0
    %272 = vmatpush1.msra.mxu0 0.0
    %273 = vmatprep.subr.mxu0 0.0
    %274 = vmatpush1.msra.mxu0 0.0
    %275 = vmatprep.subr.mxu0 0.0
    %276 = vmatpush1.msra.mxu0 0.0
    %277 = vmatprep.mubr.f32.mxu0 0.0
    %v278 = vand.u32 %v49, 4294901760
    %v279 = vsub.f32 %v49, %v278
    %280 = vmatmul.mubr.f32.gmra.mrb[0].mxu0 %v279
    %v281 = vpop.f32.mrb[0].mxu0
    %v282 = vadd.f32 %v206, %v281
    %v283 = vpop.f32.mrb[0].mxu0
    %284 = vdwg.mxu0
    %285 = vmatprep.subr.mxu0 0.0
    %v286 = vand.u32 %v38, 4294901760
    %287 = vmatpush1.msra.mxu0 %v286
    %288 = vmatprep.subr.mxu0 0.0
    %v289 = vand.u32 %v39, 4294901760
    %290 = vmatpush1.msra.mxu0 %v289
    %291 = vmatprep.subr.mxu0 0.0
    %292 = vmatpush1.msra.mxu0 0.0
    %293 = vmatprep.subr.mxu0 0.0
    %294 = vmatpush1.msra.mxu0 0.0
    %295 = vmatprep.subr.mxu0 0.0
    %296 = vmatpush1.msra.mxu0 0.0
    %297 = vmatprep.subr.mxu0 0.0
    %298 = vmatpush1.msra.mxu0 0.0
    %299 = vmatprep.subr.mxu0 0.0
    %300 = vmatpush1.msra.mxu0 0.0
    %301 = vmatprep.subr.mxu0 0.0
    %302 = vmatpush1.msra.mxu0 0.0
    %303 = vmatprep.subr.mxu0 0.0
    %304 = vmatpush1.msra.mxu0 0.0
    %305 = vmatprep.subr.mxu0 0.0
    %306 = vmatpush1.msra.mxu0 0.0
    %307 = vmatprep.subr.mxu0 0.0
    %308 = vmatpush1.msra.mxu0 0.0
    %309 = vmatprep.subr.mxu0 0.0
    %310 = vmatpush1.msra.mxu0 0.0
    %311 = vmatprep.subr.mxu0 0.0
    %312 = vmatpush1.msra.mxu0 0.0
    %313 = vmatprep.subr.mxu0 0.0
    %314 = vmatpush1.msra.mxu0 0.0
    %315 = vmatprep.subr.mxu0 0.0
    %316 = vmatpush1.msra.mxu0 0.0
    %317 = vmatprep.subr.mxu0 0.0
    %318 = vmatpush1.msra.mxu0 0.0
    %319 = vmatprep.subr.mxu0 0.0
    %320 = vmatpush1.msra.mxu0 0.0
    %321 = vmatprep.subr.mxu0 0.0
    %322 = vmatpush1.msra.mxu0 0.0
    %323 = vmatprep.subr.mxu0 0.0
    %324 = vmatpush1.msra.mxu0 0.0
    %325 = vmatprep.subr.mxu0 0.0
    %326 = vmatpush1.msra.mxu0 0.0
    %327 = vmatprep.subr.mxu0 0.0
    %328 = vmatpush1.msra.mxu0 0.0
    %329 = vmatprep.subr.mxu0 0.0
    %330 = vmatpush1.msra.mxu0 0.0
    %331 = vmatprep.subr.mxu0 0.0
    %332 = vmatpush1.msra.mxu0 0.0
    %333 = vmatprep.subr.mxu0 0.0
    %334 = vmatpush1.msra.mxu0 0.0
    %335 = vmatprep.subr.mxu0 0.0
    %336 = vmatpush1.msra.mxu0 0.0
    %337 = vmatprep.subr.mxu0 0.0
    %338 = vmatpush1.msra.mxu0 0.0
    %339 = vmatprep.subr.mxu0 0.0
    %340 = vmatpush1.msra.mxu0 0.0
    %341 = vmatprep.subr.mxu0 0.0
    %342 = vmatpush1.msra.mxu0 0.0
    %343 = vmatprep.subr.mxu0 0.0
    %344 = vmatpush1.msra.mxu0 0.0
    %345 = vmatprep.subr.mxu0 0.0
    %346 = vmatpush1.msra.mxu0 0.0
    %347 = vmatprep.subr.mxu0 0.0
    %348 = vmatpush1.msra.mxu0 0.0
    %349 = vmatprep.subr.mxu0 0.0
    %350 = vmatpush1.msra.mxu0 0.0
    %351 = vmatprep.mubr.f32.mxu0 0.0
    %v352 = vand.u32 %v49, 4294901760
    %v353 = vsub.f32 %v49, %v352
    %v354 = vand.u32 %v353, 4294901760
    %355 = vmatmul.mubr.f32.gmra.mrb[0].mxu0 %v354
    %v356 = vpop.f32.mrb[0].mxu0
    %v357 = vadd.f32 %v282, %v356
    %v358 = vpop.f32.mrb[0].mxu0
    %359 = vdwg.mxu0
    %360 = vmatprep.subr.mxu0 0.0
    %v361 = vand.u32 %v38, 4294901760
    %v362 = vsub.f32 %v38, %v361
    %v363 = vand.u32 %v362, 4294901760
    %364 = vmatpush1.msra.mxu0 %v363
    %365 = vmatprep.subr.mxu0 0.0
    %v366 = vand.u32 %v39, 4294901760
    %v367 = vsub.f32 %v39, %v366
    %v368 = vand.u32 %v367, 4294901760
    %369 = vmatpush1.msra.mxu0 %v368
    %370 = vmatprep.subr.mxu0 0.0
    %371 = vmatpush1.msra.mxu0 0.0
    %372 = vmatprep.subr.mxu0 0.0
    %373 = vmatpush1.msra.mxu0 0.0
    %374 = vmatprep.subr.mxu0 0.0
    %375 = vmatpush1.msra.mxu0 0.0
    %376 = vmatprep.subr.mxu0 0.0
    %377 = vmatpush1.msra.mxu0 0.0
    %378 = vmatprep.subr.mxu0 0.0
    %379 = vmatpush1.msra.mxu0 0.0
    %380 = vmatprep.subr.mxu0 0.0
    %381 = vmatpush1.msra.mxu0 0.0
    %382 = vmatprep.subr.mxu0 0.0
    %383 = vmatpush1.msra.mxu0 0.0
    %384 = vmatprep.subr.mxu0 0.0
    %385 = vmatpush1.msra.mxu0 0.0
    %386 = vmatprep.subr.mxu0 0.0
    %387 = vmatpush1.msra.mxu0 0.0
    %388 = vmatprep.subr.mxu0 0.0
    %389 = vmatpush1.msra.mxu0 0.0
    %390 = vmatprep.subr.mxu0 0.0
    %391 = vmatpush1.msra.mxu0 0.0
    %392 = vmatprep.subr.mxu0 0.0
    %393 = vmatpush1.msra.mxu0 0.0
    %394 = vmatprep.subr.mxu0 0.0
    %395 = vmatpush1.msra.mxu0 0.0
    %396 = vmatprep.subr.mxu0 0.0
    %397 = vmatpush1.msra.mxu0 0.0
    %398 = vmatprep.subr.mxu0 0.0
    %399 = vmatpush1.msra.mxu0 0.0
    %400 = vmatprep.subr.mxu0 0.0
    %401 = vmatpush1.msra.mxu0 0.0
    %402 = vmatprep.subr.mxu0 0.0
    %403 = vmatpush1.msra.mxu0 0.0
    %404 = vmatprep.subr.mxu0 0.0
    %405 = vmatpush1.msra.mxu0 0.0
    %406 = vmatprep.subr.mxu0 0.0
    %407 = vmatpush1.msra.mxu0 0.0
    %408 = vmatprep.subr.mxu0 0.0
    %409 = vmatpush1.msra.mxu0 0.0
    %410 = vmatprep.subr.mxu0 0.0
    %411 = vmatpush1.msra.mxu0 0.0
    %412 = vmatprep.subr.mxu0 0.0
    %413 = vmatpush1.msra.mxu0 0.0
    %414 = vmatprep.subr.mxu0 0.0
    %415 = vmatpush1.msra.mxu0 0.0
    %416 = vmatprep.subr.mxu0 0.0
    %417 = vmatpush1.msra.mxu0 0.0
    %418 = vmatprep.subr.mxu0 0.0
    %419 = vmatpush1.msra.mxu0 0.0
    %420 = vmatprep.subr.mxu0 0.0
    %421 = vmatpush1.msra.mxu0 0.0
    %422 = vmatprep.subr.mxu0 0.0
    %423 = vmatpush1.msra.mxu0 0.0
    %424 = vmatprep.subr.mxu0 0.0
    %425 = vmatpush1.msra.mxu0 0.0
    %426 = vmatprep.subr.mxu0 0.0
    %427 = vmatpush1.msra.mxu0 0.0
    %428 = vmatprep.subr.mxu0 0.0
    %429 = vmatpush1.msra.mxu0 0.0
    %430 = vmatprep.mubr.f32.mxu0 0.0
    %v431 = vand.u32 %v49, 4294901760
    %432 = vmatmul.mubr.f32.gmra.mrb[0].mxu0 %v431
    %v433 = vpop.f32.mrb[0].mxu0
    %v434 = vadd.f32 %v357, %v433
    %v435 = vpop.f32.mrb[0].mxu0
    %436 = vdwg.mxu0
    %437 = vmatprep.subr.mxu0 0.0
    %v438 = vand.u32 %v38, 4294901760
    %439 = vmatpush1.msra.mxu0 %v438
    %440 = vmatprep.subr.mxu0 0.0
    %v441 = vand.u32 %v39, 4294901760
    %442 = vmatpush1.msra.mxu0 %v441
    %443 = vmatprep.subr.mxu0 0.0
    %444 = vmatpush1.msra.mxu0 0.0
    %445 = vmatprep.subr.mxu0 0.0
    %446 = vmatpush1.msra.mxu0 0.0
    %447 = vmatprep.subr.mxu0 0.0
    %448 = vmatpush1.msra.mxu0 0.0
    %449 = vmatprep.subr.mxu0 0.0
    %450 = vmatpush1.msra.mxu0 0.0
    %451 = vmatprep.subr.mxu0 0.0
    %452 = vmatpush1.msra.mxu0 0.0
    %453 = vmatprep.subr.mxu0 0.0
    %454 = vmatpush1.msra.mxu0 0.0
    %455 = vmatprep.subr.mxu0 0.0
    %456 = vmatpush1.msra.mxu0 0.0
    %457 = vmatprep.subr.mxu0 0.0
    %458 = vmatpush1.msra.mxu0 0.0
    %459 = vmatprep.subr.mxu0 0.0
    %460 = vmatpush1.msra.mxu0 0.0
    %461 = vmatprep.subr.mxu0 0.0
    %462 = vmatpush1.msra.mxu0 0.0
    %463 = vmatprep.subr.mxu0 0.0
    %464 = vmatpush1.msra.mxu0 0.0
    %465 = vmatprep.subr.mxu0 0.0
    %466 = vmatpush1.msra.mxu0 0.0
    %467 = vmatprep.subr.mxu0 0.0
    %468 = vmatpush1.msra.mxu0 0.0
    %469 = vmatprep.subr.mxu0 0.0
    %470 = vmatpush1.msra.mxu0 0.0
    %471 = vmatprep.subr.mxu0 0.0
    %472 = vmatpush1.msra.mxu0 0.0
    %473 = vmatprep.subr.mxu0 0.0
    %474 = vmatpush1.msra.mxu0 0.0
    %475 = vmatprep.subr.mxu0 0.0
    %476 = vmatpush1.msra.mxu0 0.0
    %477 = vmatprep.subr.mxu0 0.0
    %478 = vmatpush1.msra.mxu0 0.0
    %479 = vmatprep.subr.mxu0 0.0
    %480 = vmatpush1.msra.mxu0 0.0
    %481 = vmatprep.subr.mxu0 0.0
    %482 = vmatpush1.msra.mxu0 0.0
    %483 = vmatprep.subr.mxu0 0.0
    %484 = vmatpush1.msra.mxu0 0.0
    %485 = vmatprep.subr.mxu0 0.0
    %486 = vmatpush1.msra.mxu0 0.0
    %487 = vmatprep.subr.mxu0 0.0
    %488 = vmatpush1.msra.mxu0 0.0
    %489 = vmatprep.subr.mxu0 0.0
    %490 = vmatpush1.msra.mxu0 0.0
    %491 = vmatprep.subr.mxu0 0.0
    %492 = vmatpush1.msra.mxu0 0.0
    %493 = vmatprep.subr.mxu0 0.0
    %494 = vmatpush1.msra.mxu0 0.0
    %495 = vmatprep.subr.mxu0 0.0
    %496 = vmatpush1.msra.mxu0 0.0
    %497 = vmatprep.subr.mxu0 0.0
    %498 = vmatpush1.msra.mxu0 0.0
    %499 = vmatprep.subr.mxu0 0.0
    %500 = vmatpush1.msra.mxu0 0.0
    %501 = vmatprep.subr.mxu0 0.0
    %502 = vmatpush1.msra.mxu0 0.0
    %503 = vmatprep.mubr.f32.mxu0 0.0
    %v504 = vand.u32 %v49, 4294901760
    %505 = vmatmul.mubr.f32.gmra.mrb[0].mxu0 %v504
    %v506 = vpop.f32.mrb[0].mxu0
    %v507 = vadd.f32 %v434, %v506
    %v508 = vpop.f32.mrb[0].mxu0
    %509 = vdwg.mxu0
    %v510 = vmax.f32 %v507, 0.0
    %v511 = vld [vmem:[%s4] sm:$0xff]
    %v512 = vld [vmem:[%s4 + $0x8] sm:$0xff]
    %v513 = vld [vmem:[%s4 + $0x10] sm:$0xff]
    %v514 = vld [vmem:[%s4 + $0x18] sm:$0xff]
    %v515 = vld [vmem:[%s5] sm:$0x1]
    %v517 = vlaneseq
    %v518 = vshrl.u32 %v517, 7
    %v519 = vsub.s32 0, %v518
    %v520 = vrot.slane %v515, %v519
    %vm522 = vcmask 261120
    %v524 = vsel %vm522, %v510, 0
    %526 = vmatprep.subr.mxu0 0.0
    %v527 = vand.u32 %v511, 4294901760
    %528 = vmatpush1.msra.mxu0 %v527
    %529 = vmatprep.subr.mxu0 0.0
    %v530 = vand.u32 %v512, 4294901760
    %531 = vmatpush1.msra.mxu0 %v530
    %532 = vmatprep.subr.mxu0 0.0
    %v533 = vand.u32 %v513, 4294901760
    %534 = vmatpush1.msra.mxu0 %v533
    %535 = vmatprep.subr.mxu0 0.0
    %v536 = vand.u32 %v514, 4294901760
    %537 = vmatpush1.msra.mxu0 %v536
    %538 = vmatprep.subr.mxu0 0.0
    %539 = vmatpush1.msra.mxu0 0.0
    %540 = vmatprep.subr.mxu0 0.0
    %541 = vmatpush1.msra.mxu0 0.0
    %542 = vmatprep.subr.mxu0 0.0
    %543 = vmatpush1.msra.mxu0 0.0
    %544 = vmatprep.subr.mxu0 0.0
    %545 = vmatpush1.msra.mxu0 0.0
    %546 = vmatprep.subr.mxu0 0.0
    %547 = vmatpush1.msra.mxu0 0.0
    %548 = vmatprep.subr.mxu0 0.0
    %549 = vmatpush1.msra.mxu0 0.0
    %550 = vmatprep.subr.mxu0 0.0
    %551 = vmatpush1.msra.mxu0 0.0
    %552 = vmatprep.subr.mxu0 0.0
    %553 = vmatpush1.msra.mxu0 0.0
    %554 = vmatprep.subr.mxu0 0.0
    %555 = vmatpush1.msra.mxu0 0.0
    %556 = vmatprep.subr.mxu0 0.0
    %557 = vmatpush1.msra.mxu0 0.0
    %558 = vmatprep.subr.mxu0 0.0
    %559 = vmatpush1.msra.mxu0 0.0
    %560 = vmatprep.subr.mxu0 0.0
    %561 = vmatpush1.msra.mxu0 0.0
    %562 = vmatprep.subr.mxu0 0.0
    %563 = vmatpush1.msra.mxu0 0.0
    %564 = vmatprep.subr.mxu0 0.0
    %565 = vmatpush1.msra.mxu0 0.0
    %566 = vmatprep.subr.mxu0 0.0
    %567 = vmatpush1.msra.mxu0 0.0
    %568 = vmatprep.subr.mxu0 0.0
    %569 = vmatpush1.msra.mxu0 0.0
    %570 = vmatprep.subr.mxu0 0.0
    %571 = vmatpush1.msra.mxu0 0.0
    %572 = vmatprep.subr.mxu0 0.0
    %573 = vmatpush1.msra.mxu0 0.0
    %574 = vmatprep.subr.mxu0 0.0
    %575 = vmatpush1.msra.mxu0 0.0
    %576 = vmatprep.subr.mxu0 0.0
    %577 = vmatpush1.msra.mxu0 0.0
    %578 = vmatprep.subr.mxu0 0.0
    %579 = vmatpush1.msra.mxu0 0.0
    %580 = vmatprep.subr.mxu0 0.0
    %581 = vmatpush1.msra.mxu0 0.0
    %582 = vmatprep.subr.mxu0 0.0
    %583 = vmatpush1.msra.mxu0 0.0
    %584 = vmatprep.subr.mxu0 0.0
    %585 = vmatpush1.msra.mxu0 0.0
    %586 = vmatprep.subr.mxu0 0.0
    %587 = vmatpush1.msra.mxu0 0.0
    %588 = vmatprep.subr.mxu0 0.0
    %589 = vmatpush1.msra.mxu0 0.0
    %590 = vmatprep.subr.mxu0 0.0
    %591 = vmatpush1.msra.mxu0 0.0
    %592 = vmatprep.subr.mxu0 0.0
    %593 = vmatpush1.msra.mxu0 0.0
    %594 = vmatprep.mubr.f32.mxu0 0.0
    %v595 = vand.u32 %v524, 4294901760
    %v596 = vsub.f32 %v524, %v595
    %v597 = vand.u32 %v596, 4294901760
    %v598 = vsub.f32 %v596, %v597
    %v599 = vand.u32 %v598, 4294901760
    %600 = vmatmul.mubr.f32.gmra.mrb[0].mxu0 %v599
    %v601 = vpop.f32.mrb[0].mxu0
    %v602 = vadd.f32 %v520, %v601
    %v603 = vpop.f32.mrb[0].mxu0
    %604 = vdwg.mxu0
    %605 = vmatprep.subr.mxu0 0.0
    %v606 = vand.u32 %v511, 4294901760
    %v607 = vsub.f32 %v511, %v606
    %v608 = vand.u32 %v607, 4294901760
    %v609 = vsub.f32 %v607, %v608
    %v610 = vand.u32 %v609, 4294901760
    %611 = vmatpush1.msra.mxu0 %v610
    %612 = vmatprep.subr.mxu0 0.0
    %v613 = vand.u32 %v512, 4294901760
    %v614 = vsub.f32 %v512, %v613
    %v615 = vand.u32 %v614, 4294901760
    %v616 = vsub.f32 %v614, %v615
    %v617 = vand.u32 %v616, 4294901760
    %618 = vmatpush1.msra.mxu0 %v617
    %619 = vmatprep.subr.mxu0 0.0
    %v620 = vand.u32 %v513, 4294901760
    %v621 = vsub.f32 %v513, %v620
    %v622 = vand.u32 %v621, 4294901760
    %v623 = vsub.f32 %v621, %v622
    %v624 = vand.u32 %v623, 4294901760
    %625 = vmatpush1.msra.mxu0 %v624
    %626 = vmatprep.subr.mxu0 0.0
    %v627 = vand.u32 %v514, 4294901760
    %v628 = vsub.f32 %v514, %v627
    %v629 = vand.u32 %v628, 4294901760
    %v630 = vsub.f32 %v628, %v629
    %v631 = vand.u32 %v630, 4294901760
    %632 = vmatpush1.msra.mxu0 %v631
    %633 = vmatprep.subr.mxu0 0.0
    %634 = vmatpush1.msra.mxu0 0.0
    %635 = vmatprep.subr.mxu0 0.0
    %636 = vmatpush1.msra.mxu0 0.0
    %637 = vmatprep.subr.mxu0 0.0
    %638 = vmatpush1.msra.mxu0 0.0
    %639 = vmatprep.subr.mxu0 0.0
    %640 = vmatpush1.msra.mxu0 0.0
    %641 = vmatprep.subr.mxu0 0.0
    %642 = vmatpush1.msra.mxu0 0.0
    %643 = vmatprep.subr.mxu0 0.0
    %644 = vmatpush1.msra.mxu0 0.0
    %645 = vmatprep.subr.mxu0 0.0
    %646 = vmatpush1.msra.mxu0 0.0
    %647 = vmatprep.subr.mxu0 0.0
    %648 = vmatpush1.msra.mxu0 0.0
    %649 = vmatprep.subr.mxu0 0.0
    %650 = vmatpush1.msra.mxu0 0.0
    %651 = vmatprep.subr.mxu0 0.0
    %652 = vmatpush1.msra.mxu0 0.0
    %653 = vmatprep.subr.mxu0 0.0
    %654 = vmatpush1.msra.mxu0 0.0
    %655 = vmatprep.subr.mxu0 0.0
    %656 = vmatpush1.msra.mxu0 0.0
    %657 = vmatprep.subr.mxu0 0.0
    %658 = vmatpush1.msra.mxu0 0.0
    %659 = vmatprep.subr.mxu0 0.0
    %660 = vmatpush1.msra.mxu0 0.0
    %661 = vmatprep.subr.mxu0 0.0
    %662 = vmatpush1.msra.mxu0 0.0
    %663 = vmatprep.subr.mxu0 0.0
    %664 = vmatpush1.msra.mxu0 0.0
    %665 = vmatprep.subr.mxu0 0.0
    %666 = vmatpush1.msra.mxu0 0.0
    %667 = vmatprep.subr.mxu0 0.0
    %668 = vmatpush1.msra.mxu0 0.0
    %669 = vmatprep.subr.mxu0 0.0
    %670 = vmatpush1.msra.mxu0 0.0
    %671 = vmatprep.subr.mxu0 0.0
    %672 = vmatpush1.msra.mxu0 0.0
    %673 = vmatprep.subr.mxu0 0.0
    %674 = vmatpush1.msra.mxu0 0.0
    %675 = vmatprep.subr.mxu0 0.0
    %676 = vmatpush1.msra.mxu0 0.0
    %677 = vmatprep.subr.mxu0 0.0
    %678 = vmatpush1.msra.mxu0 0.0
    %679 = vmatprep.subr.mxu0 0.0
    %680 = vmatpush1.msra.mxu0 0.0
    %681 = vmatprep.subr.mxu0 0.0
    %682 = vmatpush1.msra.mxu0 0.0
    %683 = vmatprep.subr.mxu0 0.0
    %684 = vmatpush1.msra.mxu0 0.0
    %685 = vmatprep.subr.mxu0 0.0
    %686 = vmatpush1.msra.mxu0 0.0
    %687 = vmatprep.subr.mxu0 0.0
    %688 = vmatpush1.msra.mxu0 0.0
    %689 = vmatprep.mubr.f32.mxu0 0.0
    %v690 = vand.u32 %v524, 4294901760
    %691 = vmatmul.mubr.f32.gmra.mrb[0].mxu0 %v690
    %v692 = vpop.f32.mrb[0].mxu0
    %v693 = vadd.f32 %v602, %v692
    %v694 = vpop.f32.mrb[0].mxu0
    %695 = vdwg.mxu0
    %696 = vmatprep.subr.mxu0 0.0
    %v697 = vand.u32 %v511, 4294901760
    %v698 = vsub.f32 %v511, %v697
    %699 = vmatpush1.msra.mxu0 %v698
    %700 = vmatprep.subr.mxu0 0.0
    %v701 = vand.u32 %v512, 4294901760
    %v702 = vsub.f32 %v512, %v701
    %703 = vmatpush1.msra.mxu0 %v702
    %704 = vmatprep.subr.mxu0 0.0
    %v705 = vand.u32 %v513, 4294901760
    %v706 = vsub.f32 %v513, %v705
    %707 = vmatpush1.msra.mxu0 %v706
    %708 = vmatprep.subr.mxu0 0.0
    %v709 = vand.u32 %v514, 4294901760
    %v710 = vsub.f32 %v514, %v709
    %711 = vmatpush1.msra.mxu0 %v710
    %712 = vmatprep.subr.mxu0 0.0
    %713 = vmatpush1.msra.mxu0 0.0
    %714 = vmatprep.subr.mxu0 0.0
    %715 = vmatpush1.msra.mxu0 0.0
    %716 = vmatprep.subr.mxu0 0.0
    %717 = vmatpush1.msra.mxu0 0.0
    %718 = vmatprep.subr.mxu0 0.0
    %719 = vmatpush1.msra.mxu0 0.0
    %720 = vmatprep.subr.mxu0 0.0
    %721 = vmatpush1.msra.mxu0 0.0
    %722 = vmatprep.subr.mxu0 0.0
    %723 = vmatpush1.msra.mxu0 0.0
    %724 = vmatprep.subr.mxu0 0.0
    %725 = vmatpush1.msra.mxu0 0.0
    %726 = vmatprep.subr.mxu0 0.0
    %727 = vmatpush1.msra.mxu0 0.0
    %728 = vmatprep.subr.mxu0 0.0
    %729 = vmatpush1.msra.mxu0 0.0
    %730 = vmatprep.subr.mxu0 0.0
    %731 = vmatpush1.msra.mxu0 0.0
    %732 = vmatprep.subr.mxu0 0.0
    %733 = vmatpush1.msra.mxu0 0.0
    %734 = vmatprep.subr.mxu0 0.0
    %735 = vmatpush1.msra.mxu0 0.0
    %736 = vmatprep.subr.mxu0 0.0
    %737 = vmatpush1.msra.mxu0 0.0
    %738 = vmatprep.subr.mxu0 0.0
    %739 = vmatpush1.msra.mxu0 0.0
    %740 = vmatprep.subr.mxu0 0.0
    %741 = vmatpush1.msra.mxu0 0.0
    %742 = vmatprep.subr.mxu0 0.0
    %743 = vmatpush1.msra.mxu0 0.0
    %744 = vmatprep.subr.mxu0 0.0
    %745 = vmatpush1.msra.mxu0 0.0
    %746 = vmatprep.subr.mxu0 0.0
    %747 = vmatpush1.msra.mxu0 0.0
    %748 = vmatprep.subr.mxu0 0.0
    %749 = vmatpush1.msra.mxu0 0.0
    %750 = vmatprep.subr.mxu0 0.0
    %751 = vmatpush1.msra.mxu0 0.0
    %752 = vmatprep.subr.mxu0 0.0
    %753 = vmatpush1.msra.mxu0 0.0
    %754 = vmatprep.subr.mxu0 0.0
    %755 = vmatpush1.msra.mxu0 0.0
    %756 = vmatprep.subr.mxu0 0.0
    %757 = vmatpush1.msra.mxu0 0.0
    %758 = vmatprep.subr.mxu0 0.0
    %759 = vmatpush1.msra.mxu0 0.0
    %760 = vmatprep.subr.mxu0 0.0
    %761 = vmatpush1.msra.mxu0 0.0
    %762 = vmatprep.subr.mxu0 0.0
    %763 = vmatpush1.msra.mxu0 0.0
    %764 = vmatprep.subr.mxu0 0.0
    %765 = vmatpush1.msra.mxu0 0.0
    %766 = vmatprep.subr.mxu0 0.0
    %767 = vmatpush1.msra.mxu0 0.0
    %768 = vmatprep.mubr.f32.mxu0 0.0
    %v769 = vand.u32 %v524, 4294901760
    %v770 = vsub.f32 %v524, %v769
    %771 = vmatmul.mubr.f32.gmra.mrb[0].mxu0 %v770
    %v772 = vpop.f32.mrb[0].mxu0
    %v773 = vadd.f32 %v693, %v772
    %v774 = vpop.f32.mrb[0].mxu0
    %775 = vdwg.mxu0
    %776 = vmatprep.subr.mxu0 0.0
    %v777 = vand.u32 %v511, 4294901760
    %778 = vmatpush1.msra.mxu0 %v777
    %779 = vmatprep.subr.mxu0 0.0
    %v780 = vand.u32 %v512, 4294901760
    %781 = vmatpush1.msra.mxu0 %v780
    %782 = vmatprep.subr.mxu0 0.0
    %v783 = vand.u32 %v513, 4294901760
    %784 = vmatpush1.msra.mxu0 %v783
    %785 = vmatprep.subr.mxu0 0.0
    %v786 = vand.u32 %v514, 4294901760
    %787 = vmatpush1.msra.mxu0 %v786
    %788 = vmatprep.subr.mxu0 0.0
    %789 = vmatpush1.msra.mxu0 0.0
    %790 = vmatprep.subr.mxu0 0.0
    %791 = vmatpush1.msra.mxu0 0.0
    %792 = vmatprep.subr.mxu0 0.0
    %793 = vmatpush1.msra.mxu0 0.0
    %794 = vmatprep.subr.mxu0 0.0
    %795 = vmatpush1.msra.mxu0 0.0
    %796 = vmatprep.subr.mxu0 0.0
    %797 = vmatpush1.msra.mxu0 0.0
    %798 = vmatprep.subr.mxu0 0.0
    %799 = vmatpush1.msra.mxu0 0.0
    %800 = vmatprep.subr.mxu0 0.0
    %801 = vmatpush1.msra.mxu0 0.0
    %802 = vmatprep.subr.mxu0 0.0
    %803 = vmatpush1.msra.mxu0 0.0
    %804 = vmatprep.subr.mxu0 0.0
    %805 = vmatpush1.msra.mxu0 0.0
    %806 = vmatprep.subr.mxu0 0.0
    %807 = vmatpush1.msra.mxu0 0.0
    %808 = vmatprep.subr.mxu0 0.0
    %809 = vmatpush1.msra.mxu0 0.0
    %810 = vmatprep.subr.mxu0 0.0
    %811 = vmatpush1.msra.mxu0 0.0
    %812 = vmatprep.subr.mxu0 0.0
    %813 = vmatpush1.msra.mxu0 0.0
    %814 = vmatprep.subr.mxu0 0.0
    %815 = vmatpush1.msra.mxu0 0.0
    %816 = vmatprep.subr.mxu0 0.0
    %817 = vmatpush1.msra.mxu0 0.0
    %818 = vmatprep.subr.mxu0 0.0
    %819 = vmatpush1.msra.mxu0 0.0
    %820 = vmatprep.subr.mxu0 0.0
    %821 = vmatpush1.msra.mxu0 0.0
    %822 = vmatprep.subr.mxu0 0.0
    %823 = vmatpush1.msra.mxu0 0.0
    %824 = vmatprep.subr.mxu0 0.0
    %825 = vmatpush1.msra.mxu0 0.0
    %826 = vmatprep.subr.mxu0 0.0
    %827 = vmatpush1.msra.mxu0 0.0
    %828 = vmatprep.subr.mxu0 0.0
    %829 = vmatpush1.msra.mxu0 0.0
    %830 = vmatprep.subr.mxu0 0.0
    %831 = vmatpush1.msra.mxu0 0.0
    %832 = vmatprep.subr.mxu0 0.0
    %833 = vmatpush1.msra.mxu0 0.0
    %834 = vmatprep.subr.mxu0 0.0
    %835 = vmatpush1.msra.mxu0 0.0
    %836 = vmatprep.subr.mxu0 0.0
    %837 = vmatpush1.msra.mxu0 0.0
    %838 = vmatprep.subr.mxu0 0.0
    %839 = vmatpush1.msra.mxu0 0.0
    %840 = vmatprep.subr.mxu0 0.0
    %841 = vmatpush1.msra.mxu0 0.0
    %842 = vmatprep.subr.mxu0 0.0
    %843 = vmatpush1.msra.mxu0 0.0
    %844 = vmatprep.mubr.f32.mxu0 0.0
    %v845 = vand.u32 %v524, 4294901760
    %v846 = vsub.f32 %v524, %v845
    %v847 = vand.u32 %v846, 4294901760
    %848 = vmatmul.mubr.f32.gmra.mrb[0].mxu0 %v847
    %v849 = vpop.f32.mrb[0].mxu0
    %v850 = vadd.f32 %v773, %v849
    %v851 = vpop.f32.mrb[0].mxu0
    %852 = vdwg.mxu0
    %853 = vmatprep.subr.mxu0 0.0
    %v854 = vand.u32 %v511, 4294901760
    %v855 = vsub.f32 %v511, %v854
    %v856 = vand.u32 %v855, 4294901760
    %857 = vmatpush1.msra.mxu0 %v856
    %858 = vmatprep.subr.mxu0 0.0
    %v859 = vand.u32 %v512, 4294901760
    %v860 = vsub.f32 %v512, %v859
    %v861 = vand.u32 %v860, 4294901760
    %862 = vmatpush1.msra.mxu0 %v861
    %863 = vmatprep.subr.mxu0 0.0
    %v864 = vand.u32 %v513, 4294901760
    %v865 = vsub.f32 %v513, %v864
    %v866 = vand.u32 %v865, 4294901760
    %867 = vmatpush1.msra.mxu0 %v866
    %868 = vmatprep.subr.mxu0 0.0
    %v869 = vand.u32 %v514, 4294901760
    %v870 = vsub.f32 %v514, %v869
    %v871 = vand.u32 %v870, 4294901760
    %872 = vmatpush1.msra.mxu0 %v871
    %873 = vmatprep.subr.mxu0 0.0
    %874 = vmatpush1.msra.mxu0 0.0
    %875 = vmatprep.subr.mxu0 0.0
    %876 = vmatpush1.msra.mxu0 0.0
    %877 = vmatprep.subr.mxu0 0.0
    %878 = vmatpush1.msra.mxu0 0.0
    %879 = vmatprep.subr.mxu0 0.0
    %880 = vmatpush1.msra.mxu0 0.0
    %881 = vmatprep.subr.mxu0 0.0
    %882 = vmatpush1.msra.mxu0 0.0
    %883 = vmatprep.subr.mxu0 0.0
    %884 = vmatpush1.msra.mxu0 0.0
    %885 = vmatprep.subr.mxu0 0.0
    %886 = vmatpush1.msra.mxu0 0.0
    %887 = vmatprep.subr.mxu0 0.0
    %888 = vmatpush1.msra.mxu0 0.0
    %889 = vmatprep.subr.mxu0 0.0
    %890 = vmatpush1.msra.mxu0 0.0
    %891 = vmatprep.subr.mxu0 0.0
    %892 = vmatpush1.msra.mxu0 0.0
    %893 = vmatprep.subr.mxu0 0.0
    %894 = vmatpush1.msra.mxu0 0.0
    %895 = vmatprep.subr.mxu0 0.0
    %896 = vmatpush1.msra.mxu0 0.0
    %897 = vmatprep.subr.mxu0 0.0
    %898 = vmatpush1.msra.mxu0 0.0
    %899 = vmatprep.subr.mxu0 0.0
    %900 = vmatpush1.msra.mxu0 0.0
    %901 = vmatprep.subr.mxu0 0.0
    %902 = vmatpush1.msra.mxu0 0.0
    %903 = vmatprep.subr.mxu0 0.0
    %904 = vmatpush1.msra.mxu0 0.0
    %905 = vmatprep.subr.mxu0 0.0
    %906 = vmatpush1.msra.mxu0 0.0
    %907 = vmatprep.subr.mxu0 0.0
    %908 = vmatpush1.msra.mxu0 0.0
    %909 = vmatprep.subr.mxu0 0.0
    %910 = vmatpush1.msra.mxu0 0.0
    %911 = vmatprep.subr.mxu0 0.0
    %912 = vmatpush1.msra.mxu0 0.0
    %913 = vmatprep.subr.mxu0 0.0
    %914 = vmatpush1.msra.mxu0 0.0
    %915 = vmatprep.subr.mxu0 0.0
    %916 = vmatpush1.msra.mxu0 0.0
    %917 = vmatprep.subr.mxu0 0.0
    %918 = vmatpush1.msra.mxu0 0.0
    %919 = vmatprep.subr.mxu0 0.0
    %920 = vmatpush1.msra.mxu0 0.0
    %921 = vmatprep.subr.mxu0 0.0
    %922 = vmatpush1.msra.mxu0 0.0
    %923 = vmatprep.subr.mxu0 0.0
    %924 = vmatpush1.msra.mxu0 0.0
    %925 = vmatprep.subr.mxu0 0.0
    %926 = vmatpush1.msra.mxu0 0.0
    %927 = vmatprep.subr.mxu0 0.0
    %928 = vmatpush1.msra.mxu0 0.0
    %929 = vmatprep.mubr.f32.mxu0 0.0
    %v930 = vand.u32 %v524, 4294901760
    %931 = vmatmul.mubr.f32.gmra.mrb[0].mxu0 %v930
    %v932 = vpop.f32.mrb[0].mxu0
    %v933 = vadd.f32 %v850, %v932
    %v934 = vpop.f32.mrb[0].mxu0
    %935 = vdwg.mxu0
    %936 = vmatprep.subr.mxu0 0.0
    %v937 = vand.u32 %v511, 4294901760
    %938 = vmatpush1.msra.mxu0 %v937
    %939 = vmatprep.subr.mxu0 0.0
    %v940 = vand.u32 %v512, 4294901760
    %941 = vmatpush1.msra.mxu0 %v940
    %942 = vmatprep.subr.mxu0 0.0
    %v943 = vand.u32 %v513, 4294901760
    %944 = vmatpush1.msra.mxu0 %v943
    %945 = vmatprep.subr.mxu0 0.0
    %v946 = vand.u32 %v514, 4294901760
    %947 = vmatpush1.msra.mxu0 %v946
    %948 = vmatprep.subr.mxu0 0.0
    %949 = vmatpush1.msra.mxu0 0.0
    %950 = vmatprep.subr.mxu0 0.0
    %951 = vmatpush1.msra.mxu0 0.0
    %952 = vmatprep.subr.mxu0 0.0
    %953 = vmatpush1.msra.mxu0 0.0
    %954 = vmatprep.subr.mxu0 0.0
    %955 = vmatpush1.msra.mxu0 0.0
    %956 = vmatprep.subr.mxu0 0.0
    %957 = vmatpush1.msra.mxu0 0.0
    %958 = vmatprep.subr.mxu0 0.0
    %959 = vmatpush1.msra.mxu0 0.0
    %960 = vmatprep.subr.mxu0 0.0
    %961 = vmatpush1.msra.mxu0 0.0
    %962 = vmatprep.subr.mxu0 0.0
    %963 = vmatpush1.msra.mxu0 0.0
    %964 = vmatprep.subr.mxu0 0.0
    %965 = vmatpush1.msra.mxu0 0.0
    %966 = vmatprep.subr.mxu0 0.0
    %967 = vmatpush1.msra.mxu0 0.0
    %968 = vmatprep.subr.mxu0 0.0
    %969 = vmatpush1.msra.mxu0 0.0
    %970 = vmatprep.subr.mxu0 0.0
    %971 = vmatpush1.msra.mxu0 0.0
    %972 = vmatprep.subr.mxu0 0.0
    %973 = vmatpush1.msra.mxu0 0.0
    %974 = vmatprep.subr.mxu0 0.0
    %975 = vmatpush1.msra.mxu0 0.0
    %976 = vmatprep.subr.mxu0 0.0
    %977 = vmatpush1.msra.mxu0 0.0
    %978 = vmatprep.subr.mxu0 0.0
    %979 = vmatpush1.msra.mxu0 0.0
    %980 = vmatprep.subr.mxu0 0.0
    %981 = vmatpush1.msra.mxu0 0.0
    %982 = vmatprep.subr.mxu0 0.0
    %983 = vmatpush1.msra.mxu0 0.0
    %984 = vmatprep.subr.mxu0 0.0
    %985 = vmatpush1.msra.mxu0 0.0
    %986 = vmatprep.subr.mxu0 0.0
    %987 = vmatpush1.msra.mxu0 0.0
    %988 = vmatprep.subr.mxu0 0.0
    %989 = vmatpush1.msra.mxu0 0.0
    %990 = vmatprep.subr.mxu0 0.0
    %991 = vmatpush1.msra.mxu0 0.0
    %992 = vmatprep.subr.mxu0 0.0
    %993 = vmatpush1.msra.mxu0 0.0
    %994 = vmatprep.subr.mxu0 0.0
    %995 = vmatpush1.msra.mxu0 0.0
    %996 = vmatprep.subr.mxu0 0.0
    %997 = vmatpush1.msra.mxu0 0.0
    %998 = vmatprep.subr.mxu0 0.0
    %999 = vmatpush1.msra.mxu0 0.0
    %1000 = vmatprep.subr.mxu0 0.0
    %1001 = vmatpush1.msra.mxu0 0.0
    %1002 = vmatprep.subr.mxu0 0.0
    %1003 = vmatpush1.msra.mxu0 0.0
    %1004 = vmatprep.mubr.f32.mxu0 0.0
    %v1005 = vand.u32 %v524, 4294901760
    %1006 = vmatmul.mubr.f32.gmra.mrb[0].mxu0 %v1005
    %v1007 = vpop.f32.mrb[0].mxu0
    %v1008 = vadd.f32 %v933, %v1007
    %v1009 = vpop.f32.mrb[0].mxu0
    %1010 = vdwg.mxu0
    %v1011 = vtanh.pop %v1008
    %s1012 = sld [smem:[#allocation2]]
    %s1013 = sld [smem:[#allocation2 + $0x1]]
    %v1014 = vstv %s1012
    %v1015 = vmul.f32 %v1014, %v1011
    %v1016 = vstv %s1013
    %v1017 = vadd.f32 %v1015, %v1016
    %vm1018 = vcmask 64512
    %1019 = vst.msk [vmem:[#allocation5] sm:$0xff] %vm1018, %v1017
    // Predicated region
    $region30: #{tpu_custom_call.1} parent=1 // pred_check
      _
    $region31: #{tpu_custom_call.1} parent=1 // pred_check_branch
      %1021 = sbr.rel (0) target = $region33
    $region32: #{tpu_custom_call.1} parent=1 // pred_region
      %s1023 = ssub.s32 128, 128
      %1024 = vsyncadd [#allocation3], %s1023
      %s1026 = sshll.u32 [#allocation5], 4
      %s1027 = int_to_ptr.vmem [resolvable:$true] %s1026
      %1029 = dma.vmem_to_hbm [thread:$0]  %s1027, 128, %s6, [#allocation3]
    $region33: #{tpu_custom_call.1} parent=1 // pred_fallthru
      _
    // Predicated region
    $region34: #{tpu_custom_call.1} parent=1 // pred_check
      _
    $region35: #{tpu_custom_call.1} parent=1 // pred_check_branch
      %1031 = sbr.rel (0) target = $region37
    $region36: #{tpu_custom_call.1} parent=1 // pred_region
      %1032 = dma.done [#allocation3], 128
    $region37: #{tpu_custom_call.1} parent=1 // pred_fallthru
      _
    %1033 = vsyncpa [#allocation3], 1
    %1034 = vsyncpa [#allocation4], 1

</llo_original>
